<compile_context>
chip_gen: v7x
topology: tpu7x:2x2x1
jax: 0.10.0
libtpu: 0.0.40
codegen_flags: <defaults>
</compile_context>

<pallas_src>
import math
import functools

import jax
import jax.numpy as jnp
from jax import lax
from jax.experimental import pallas as pl
from jax.experimental.pallas import tpu as pltpu


def _round_up(x, m):
    return ((x + m - 1) // m) * m


def _input_layer_kernel(x_ref, w_ref, b_ref, pe_ref, out_ref):
    # x_ref  : (tm, E)   flattened (seq*batch) rows
    # w_ref  : (D, E)    Linear weight in torch layout (contract on E)
    # b_ref  : (1, D)    Linear bias
    # pe_ref : (tm, D)   positional-encoding slab matching the row tile
    # out_ref: (tm, D)
    x = x_ref[...]
    w = w_ref[...]
    # (tm, E) x (D, E) contracting E -> (tm, D); avoids a transposed weight copy.
    y = lax.dot_general(
        x, w,
        dimension_numbers=(((1,), (1,)), ((), ())),
        preferred_element_type=jnp.float32,
    )
    y = y + b_ref[...]           # broadcast (1, D) over rows
    y = jnp.maximum(y, 0.0)      # ReLU (f32)
    y = y + pe_ref[...]          # positional encoding
    out_ref[...] = y.astype(out_ref.dtype)


def make_positional_encoding(d_model, max_len, dtype=jnp.float32):
    """Standard sinusoidal PE, shape (max_len, d_model)."""
    position = jnp.arange(max_len, dtype=jnp.float32)[:, None]            # (max_len, 1)
    div_term = jnp.exp(
        jnp.arange(0, d_model, 2, dtype=jnp.float32) * (-math.log(10000.0) / d_model)
    )                                                                     # (d_model/2,)
    ang = position * div_term                                             # (max_len, d_model/2)
    pe = jnp.zeros((max_len, d_model), dtype=jnp.float32)
    pe = pe.at[:, 0::2].set(jnp.sin(ang))
    pe = pe.at[:, 1::2].set(jnp.cos(ang))
    return pe.astype(dtype)


@functools.partial(jax.jit, static_argnames=("tile_m",))
def input_layer_forward(src, weight, bias, pe_full, *, tile_m=256):
    """src: (S, B, E); weight: (D, E) torch-layout; bias: (D,); pe_full: (max_len, D)."""
    S, B, E = src.shape
    D, E2 = weight.shape
    assert E2 == E, f"weight E dim {E2} != src E dim {E}"
    assert S <= pe_full.shape[0], f"seq_len {S} exceeds PE max_len {pe_full.shape[0]}"

    M = S * B
    x2d = src.reshape(M, E)
    # Pre-broadcast PE over batch into an (M, D) slab matching the row tiling.
    pe_slab = jnp.broadcast_to(pe_full[:S, None, :], (S, B, D)).reshape(M, D)

    # Row tile: one block if M is small, otherwise tile_m (multiple of 8/128).
    tm = min(tile_m, _round_up(M, 8))
    Mp = _round_up(M, tm)
    if Mp != M:
        pad = Mp - M
        x2d = jnp.pad(x2d, ((0, pad), (0, 0)))
        pe_slab = jnp.pad(pe_slab, ((0, pad), (0, 0)))

    out2d = pl.pallas_call(
        _input_layer_kernel,
        out_shape=jax.ShapeDtypeStruct((Mp, D), src.dtype),
        grid_spec=pltpu.PrefetchScalarGridSpec(
            num_scalar_prefetch=0,
            grid=(Mp // tm,),
            in_specs=[
                pl.BlockSpec((tm, E), lambda i: (i, 0)),   # src rows (tiled)
                pl.BlockSpec((D, E), lambda i: (0, 0)),    # weight, VMEM-resident
                pl.BlockSpec((1, D), lambda i: (0, 0)),    # bias, VMEM-resident
                pl.BlockSpec((tm, D), lambda i: (i, 0)),   # PE slab rows (tiled)
            ],
            out_specs=pl.BlockSpec((tm, D), lambda i: (i, 0)),
        ),
        compiler_params=pltpu.CompilerParams(
            dimension_semantics=("parallel",),             # shard rows across TCs (v7x)
        ),
    )(x2d, weight, bias.reshape(1, D), pe_slab)

    return out2d[:M].reshape(S, B, D)


def reference_forward(src, weight, bias, pe_full):
    """Pure-JAX reference matching the PyTorch forward (eval mode)."""
    S = src.shape[0]
    x = jnp.einsum("sbe,de->sbd", src, weight) + bias
    x = jnp.maximum(x, 0.0)
    return x + pe_full[:S][:, None, :]


if __name__ == "__main__":
    # Small shapes consistent with the module.
    embedding_size = 16
    d_model = 32
    max_len = 16
    dropout = 0.1   # unused at inference (identity)
    S, B = 8, 2

    key = jax.random.PRNGKey(0)
    k_src, k_w = jax.random.split(key)

    src = jax.random.normal(k_src, (S, B, embedding_size), dtype=jnp.float32)

    # Deterministic parameter init mimicking init_weights(initrange=0.1):
    # weight ~ U(-0.1, 0.1), bias = 0.  Torch Linear weight layout is (d_model, embedding_size).
    weight = jax.random.uniform(
        k_w, (d_model, embedding_size), dtype=jnp.float32, minval=-0.1, maxval=0.1
    )
    bias = jnp.zeros((d_model,), dtype=jnp.float32)

    pe_full = make_positional_encoding(d_model, max_len)

    out = input_layer_forward(src, weight, bias, pe_full)
    out = jax.block_until_ready(out)

    ref = reference_forward(src, weight, bias, pe_full)
    assert out.shape == (S, B, d_model)
    assert jnp.allclose(out, ref, atol=1e-5, rtol=1e-5), "mismatch vs reference"

    print("KERNEL_OK")
</pallas_src>

<mosaic_0001>
module attributes {stable_mosaic.version = 11 : i64} {
  func.func @_input_layer_kernel(%arg0: i32, %arg1: memref<16x16xf32, #tpu.memory_space<vmem>>, %arg2: memref<32x16xf32, #tpu.memory_space<vmem>>, %arg3: memref<1x32xf32, #tpu.memory_space<vmem>>, %arg4: memref<16x32xf32, #tpu.memory_space<vmem>>, %arg5: memref<16x32xf32, #tpu.memory_space<vmem>>) attributes {dimension_semantics = [#tpu.dimension_semantics<parallel>], iteration_bounds = array<i64: 1>, scalar_prefetch = 0 : i64, scratch_operands = 0 : i64, tpu.core_type = #tpu.core_type<tc>, window_params = [{transform_indices = @transform_0, window_bounds = array<i64: 16, 16>}, {pipeline_mode = #tpu.pipeline_mode<synchronous>, transform_indices = @transform_1, window_bounds = array<i64: 32, 16>}, {pipeline_mode = #tpu.pipeline_mode<synchronous>, transform_indices = @transform_2, window_bounds = array<i64: 1, 32>}, {transform_indices = @transform_3, window_bounds = array<i64: 16, 32>}, {transform_indices = @transform_4, window_bounds = array<i64: 16, 32>}]} {
    %c0 = arith.constant 0 : index
    %c0_0 = arith.constant 0 : index
    %0 = vector.load %arg1[%c0, %c0_0] : memref<16x16xf32, #tpu.memory_space<vmem>>, vector<16x16xf32>
    %c0_1 = arith.constant 0 : index
    %c0_2 = arith.constant 0 : index
    %1 = vector.load %arg2[%c0_1, %c0_2] : memref<32x16xf32, #tpu.memory_space<vmem>>, vector<32x16xf32>
    %cst = arith.constant dense<0.000000e+00> : vector<16x32xf32>
    %2 = tpu.matmul %0, %1, %cst {dimension_numbers = #tpu.dot_dimension_numbers<[1], [1], [0], [0], [0, 0, 1, 0], [], []>} : vector<16x16xf32>, vector<32x16xf32>, vector<16x32xf32> -> vector<16x32xf32>
    %c0_3 = arith.constant 0 : index
    %c0_4 = arith.constant 0 : index
    %3 = vector.load %arg3[%c0_3, %c0_4] : memref<1x32xf32, #tpu.memory_space<vmem>>, vector<1x32xf32>
    %4 = vector.broadcast %3 : vector<1x32xf32> to vector<16x32xf32>
    %5 = arith.addf %2, %4 : vector<16x32xf32>
    %cst_5 = arith.constant 0.000000e+00 : f32
    %6 = vector.broadcast %cst_5 : f32 to vector<16x32xf32>
    %7 = arith.maximumf %5, %6 : vector<16x32xf32>
    %c0_6 = arith.constant 0 : index
    %c0_7 = arith.constant 0 : index
    %8 = vector.load %arg4[%c0_6, %c0_7] : memref<16x32xf32, #tpu.memory_space<vmem>>, vector<16x32xf32>
    %9 = arith.addf %7, %8 : vector<16x32xf32>
    %c0_8 = arith.constant 0 : index
    %c0_9 = arith.constant 0 : index
    %10 = vector.load %arg5[%c0_8, %c0_9] : memref<16x32xf32, #tpu.memory_space<vmem>>, vector<16x32xf32>
    tpu.vector_store %arg5[%c0_8, %c0_9], %9 {strides = array<i32>} : memref<16x32xf32, #tpu.memory_space<vmem>>, vector<16x32xf32>,
    return
  }
  func.func @transform_0(%arg0: i32) -> (i32, i32) {
    %c0_i32 = arith.constant 0 : i32
    %c0_i32_0 = arith.constant 0 : i32
    return %arg0, %c0_i32 : i32, i32
  }
  func.func @transform_1(%arg0: i32) -> (i32, i32) {
    %c0_i32 = arith.constant 0 : i32
    %c0_i32_0 = arith.constant 0 : i32
    %c0_i32_1 = arith.constant 0 : i32
    return %c0_i32, %c0_i32_0 : i32, i32
  }
  func.func @transform_2(%arg0: i32) -> (i32, i32) {
    %c0_i32 = arith.constant 0 : i32
    %c0_i32_0 = arith.constant 0 : i32
    %c0_i32_1 = arith.constant 0 : i32
    return %c0_i32, %c0_i32_0 : i32, i32
  }
  func.func @transform_3(%arg0: i32) -> (i32, i32) {
    %c0_i32 = arith.constant 0 : i32
    %c0_i32_0 = arith.constant 0 : i32
    return %arg0, %c0_i32 : i32, i32
  }
  func.func @transform_4(%arg0: i32) -> (i32, i32) {
    %c0_i32 = arith.constant 0 : i32
    %c0_i32_0 = arith.constant 0 : i32
    return %arg0, %c0_i32 : i32, i32
  }
}

</mosaic_0001>

<llo_original>
// kernel: input_layer_forward.1
$region0: #{input_layer_forward.1}
  #allocation0 [shape = 'u32[]', space=smem, size = 0x4, offset = 0x4, fixed_abs, tag = 'smem constant byte address 0x4 - core index']
  #allocation1 [shape = 'u32[144,128]{1,0:T(1,128)}', space=vmem, size = 0x12000, scoped, tag = 'internal scratch']
  %s0 = inlined_call_operand.vmem [shape: f32[16,16], index: 0, kind: input, shape index: {}]
  %s1 = inlined_call_operand.vmem [shape: f32[32,16], index: 1, kind: input, shape index: {}]
  %s2 = inlined_call_operand.vmem [shape: f32[1,32], index: 2, kind: input, shape index: {}]
  %s3 = inlined_call_operand.vmem [shape: f32[16,32], index: 3, kind: input, shape index: {}]
  %s4 = inlined_call_operand.hbm [shape: f32[16,32], index: 4, kind: output, shape index: {}]
  %s5 = sld [smem:[#allocation0]]
  $region26: #{input_layer_forward.1} parent=0
    _
  %s7 = ssub.s32 1, %s5
  %s8 = scalar_select 0, %s7, %s5
  $region1: #{input_layer_forward.1} parent=0
    #allocation2 [shape = 'u8[8192]{0}', space=vmem, size = 0x2000, scoped, tag = 'output window, operand 0, single buffered']
    #allocation3 [shape = 's32[1]{0}', space=sflag, size = 0x4, scoped, tag = 'scoped memory for input_layer_forward.1']
    %9 = vsyncpa [#allocation3], 0
    // Predicated region
    $region2: #{input_layer_forward.1} parent=1 // pred_check
      _
    $region3: #{input_layer_forward.1} parent=1 // pred_check_branch
      %11 = sbr.rel (0) target = $region5
    $region4: #{input_layer_forward.1} parent=1 // pred_region
      _
    $region5: #{input_layer_forward.1} parent=1 // pred_fallthru
      _
    // Predicated region
    $region6: #{input_layer_forward.1} parent=1 // pred_check
      _
    $region7: #{input_layer_forward.1} parent=1 // pred_check_branch
      %13 = sbr.rel (0) target = $region9
    $region8: #{input_layer_forward.1} parent=1 // pred_region
      _
    $region9: #{input_layer_forward.1} parent=1 // pred_fallthru
      _
    // Predicated region
    $region10: #{input_layer_forward.1} parent=1 // pred_check
      _
    $region11: #{input_layer_forward.1} parent=1 // pred_check_branch
      %15 = sbr.rel (0) target = $region13
    $region12: #{input_layer_forward.1} parent=1 // pred_region
      _
    $region13: #{input_layer_forward.1} parent=1 // pred_fallthru
      _
    // Predicated region
    $region14: #{input_layer_forward.1} parent=1 // pred_check
      _
    $region15: #{input_layer_forward.1} parent=1 // pred_check_branch
      %17 = sbr.rel (0) target = $region17
    $region16: #{input_layer_forward.1} parent=1 // pred_region
      _
    $region17: #{input_layer_forward.1} parent=1 // pred_fallthru
      _
    %v18 = vld [vmem:[%s0] sm:$0xff]
    %v19 = vld [vmem:[%s0 + $0x8] sm:$0xff]
    %v20 = vld [vmem:[%s1] sm:$0xff]
    %v21 = vld [vmem:[%s1 + $0x8] sm:$0xff]
    %v22 = vld [vmem:[%s1 + $0x10] sm:$0xff]
    %v23 = vld [vmem:[%s1 + $0x18] sm:$0xff]
    %v24 = vld [vmem:[%s2] sm:$0x1]
    %v26 = vlaneseq
    %v27 = vshrl.u32 %v26, 7
    %v28 = vsub.s32 0, %v27
    %v29 = vrot.slane %v24, %v28
    %vm31 = vcmask 130048
    %v33 = vsel %vm31, %v18, 0
    %v36 = vsel %vm31, %v19, 0
    %v39 = vsel %vm31, %v20, 0
    %v42 = vsel %vm31, %v21, 0
    %v45 = vsel %vm31, %v22, 0
    %v48 = vsel %vm31, %v23, 0
    %50 = vmatprep.subr.mxu0 0.0
    %51 = vmatpush1.xpose.msra.mxu0 %v39
    %52 = vmatprep.subr.mxu0 0.0
    %53 = vmatpush1.xpose.msra.mxu0 %v42
    %54 = vmatprep.subr.mxu0 0.0
    %55 = vmatpush1.xpose.msra.mxu0 %v45
    %56 = vmatprep.subr.mxu0 0.0
    %57 = vmatpush1.xpose.msra.mxu0 %v48
    %58 = vmatprep.subr.mxu0 0.0
    %59 = vmatpush1.xpose.msra.mxu0 0.0
    %60 = vmatprep.subr.mxu0 0.0
    %61 = vmatpush1.xpose.msra.mxu0 0.0
    %62 = vmatprep.subr.mxu0 0.0
    %63 = vmatpush1.xpose.msra.mxu0 0.0
    %64 = vmatprep.subr.mxu0 0.0
    %65 = vmatpush1.xpose.msra.mxu0 0.0
    %66 = vmatprep.subr.mxu0 0.0
    %67 = vmatpush1.xpose.msra.mxu0 0.0
    %68 = vmatprep.subr.mxu0 0.0
    %69 = vmatpush1.xpose.msra.mxu0 0.0
    %70 = vmatprep.subr.mxu0 0.0
    %71 = vmatpush1.xpose.msra.mxu0 0.0
    %72 = vmatprep.subr.mxu0 0.0
    %73 = vmatpush1.xpose.msra.mxu0 0.0
    %74 = vmatprep.subr.mxu0 0.0
    %75 = vmatpush1.xpose.msra.mxu0 0.0
    %76 = vmatprep.subr.mxu0 0.0
    %77 = vmatpush1.xpose.msra.mxu0 0.0
    %78 = vmatprep.subr.mxu0 0.0
    %79 = vmatpush1.xpose.msra.mxu0 0.0
    %80 = vmatprep.subr.mxu0 0.0
    %81 = vmatpush1.xpose.msra.mxu0 0.0
    %82 = vmatprep.subr.mxu0 0.0
    %83 = vmatpush1.xpose.msra.mxu0 0.0
    %84 = vmatprep.subr.mxu0 0.0
    %85 = vmatpush1.xpose.msra.mxu0 0.0
    %86 = vmatprep.subr.mxu0 0.0
    %87 = vmatpush1.xpose.msra.mxu0 0.0
    %88 = vmatprep.subr.mxu0 0.0
    %89 = vmatpush1.xpose.msra.mxu0 0.0
    %90 = vmatprep.subr.mxu0 0.0
    %91 = vmatpush1.xpose.msra.mxu0 0.0
    %92 = vmatprep.subr.mxu0 0.0
    %93 = vmatpush1.xpose.msra.mxu0 0.0
    %94 = vmatprep.subr.mxu0 0.0
    %95 = vmatpush1.xpose.msra.mxu0 0.0
    %96 = vmatprep.subr.mxu0 0.0
    %97 = vmatpush1.xpose.msra.mxu0 0.0
    %98 = vmatprep.subr.mxu0 0.0
    %99 = vmatpush1.xpose.msra.mxu0 0.0
    %100 = vmatprep.subr.mxu0 0.0
    %101 = vmatpush1.xpose.msra.mxu0 0.0
    %102 = vmatprep.subr.mxu0 0.0
    %103 = vmatpush1.xpose.msra.mxu0 0.0
    %104 = vmatprep.subr.mxu0 0.0
    %105 = vmatpush1.xpose.msra.mxu0 0.0
    %106 = vmatprep.subr.mxu0 0.0
    %107 = vmatpush1.xpose.msra.mxu0 0.0
    %108 = vmatprep.subr.mxu0 0.0
    %109 = vmatpush1.xpose.msra.mxu0 0.0
    %110 = vmatprep.subr.mxu0 0.0
    %111 = vmatpush1.xpose.msra.mxu0 0.0
    %112 = vmatprep.subr.mxu0 0.0
    %113 = vmatpush1.xpose.msra.mxu0 0.0
    %114 = vmatprep.mubr.f32.mxu0 0.0
    %115 = vmatmul.mubr.f32.gmra.mrb[0].mxu0 %v33
    %v116 = vpop.f32.mrb[0].mxu0
    %v117 = vadd.f32 %v29, %v116
    %v118 = vpop.f32.mrb[0].mxu0
    %119 = vmatprep.mubr.f32.mxu0 0.0
    %120 = vmatmul.mubr.f32.gmra.mrb[0].mxu0 %v36
    %v121 = vpop.f32.mrb[0].mxu0
    %v122 = vadd.f32 %v29, %v121
    %v123 = vpop.f32.mrb[0].mxu0
    %124 = vdwg.mxu0
    %v125 = vmax.f32 %v117, 0.0
    %v126 = vmax.f32 %v122, 0.0
    %v127 = vld [vmem:[%s3] sm:$0xff]
    %v128 = vld [vmem:[%s3 + $0x8] sm:$0xff]
    %v129 = vadd.f32 %v125, %v127
    %v130 = vadd.f32 %v126, %v128
    %vm131 = vcmask 261120
    %132 = vst.msk [vmem:[#allocation2] sm:$0xff] %vm131, %v129
    %133 = vst.msk [vmem:[#allocation2 + $0x8] sm:$0xff] %vm131, %v130
    // Predicated region
    $region18: #{input_layer_forward.1} parent=1 // pred_check
      _
    $region19: #{input_layer_forward.1} parent=1 // pred_check_branch
      %135 = sbr.rel (0) target = $region21
    $region20: #{input_layer_forward.1} parent=1 // pred_region
      %s137 = ssub.s32 256, 256
      %138 = vsyncadd [#allocation3], %s137
      %s139 = sshll.u32 [#allocation2], 4
      %s140 = int_to_ptr.vmem [resolvable:$true] %s139
      %145 = dma.vmem_to_hbm [thread:$0]  %s140, 256, %s4, [#allocation3], 128, 128, 8
    $region21: #{input_layer_forward.1} parent=1 // pred_fallthru
      _
    // Predicated region
    $region22: #{input_layer_forward.1} parent=1 // pred_check
      _
    $region23: #{input_layer_forward.1} parent=1 // pred_check_branch
      %147 = sbr.rel (0) target = $region25
    $region24: #{input_layer_forward.1} parent=1 // pred_region
      %148 = dma.done [#allocation3], 256
    $region25: #{input_layer_forward.1} parent=1 // pred_fallthru
      _
    %149 = vsyncpa [#allocation3], 1

</llo_original>
